<compile_context>
chip_gen: v7x
topology: tpu7x:2x2x1
jax: 0.10.0
libtpu: 0.0.40
codegen_flags: <defaults>
</compile_context>

<pallas_src>
import jax
import jax.numpy as jnp
from jax.experimental import pallas as pl
from jax.experimental.pallas import tpu as pltpu


def _affine_kernel(w_ref, b_ref, x_ref, o_ref):
    # w_ref / b_ref live in SMEM (scalar params), x_ref / o_ref in VMEM.
    w = w_ref[0]
    b = b_ref[0]
    o_ref[...] = (x_ref[...] * w + b).astype(o_ref.dtype)


# Lane-dense last dim (>=128) that divides the flat size -> fully unmasked,
# contiguous vector stores.  Contiguity of the (block_rows, lanes) slab matters
# more than the exact lane count, so a short candidate list is enough.
_LANE_CANDIDATES = (2048, 1024, 512, 256, 128)
_MiB = 1024 * 1024


def _tpu_generation():
    try:
        kind = jax.devices()[0].device_kind.lower()
    except Exception:
        return "unknown"
    if "v7" in kind:
        return "v7x"
    if "v6" in kind:
        return "v6e"
    if "v5p" in kind:
        return "v5p"
    if "v5" in kind:
        return "v5e"
    return "unknown"


def _block_budget(gen):
    """Returns (target block bytes, scoped VMEM limit bytes) per generation."""
    if gen == "v7x":
        # 3.2 TB/s HBM: ~4 MiB blocks keep the ~0.35us per-grid-step overhead
        # <10%.  4 x 4 MiB double buffers stay inside a 24 MiB/TC budget when
        # CORE_PARALLEL shards the row-block axis (64 MiB physical VMEM/TC).
        return 4 * _MiB, 24 * _MiB
    if gen in ("v6e", "v5p"):
        # 1.4 TB/s: 4 MiB blocks sit on the measured 85-86% roofline plateau;
        # 16 MiB of double buffers fits the 32 MiB scoped default.
        return 4 * _MiB, 32 * _MiB
    if gen == "v5e":
        # v5e scoped default is only 16 MiB; 2 MiB blocks (8 MiB of buffers)
        # are already <8% per-step overhead at 0.82 TB/s.
        return 2 * _MiB, 16 * _MiB
    # Unknown backend: conservative.
    return 2 * _MiB, 16 * _MiB


def _affine_2d(x2d, weight, bias, *, alias_input):
    """Runs the Pallas kernel on a (rows, lanes) slab, lanes % 128 == 0."""
    rows, lanes = x2d.shape
    dtype = x2d.dtype
    itemsize = x2d.dtype.itemsize
    gen = _tpu_generation()
    target_block_bytes, vmem_limit = _block_budget(gen)

    # Native sublane multiple for the dtype: 8 (f32), 16 (bf16), 32 (i8/fp8).
    sub_align = max(8, 32 // itemsize)
    block_rows = (target_block_bytes // (lanes * itemsize)) // sub_align * sub_align
    block_rows = max(sub_align, block_rows)
    if block_rows >= rows:
        block_rows = rows  # single full block (equal-to-full-dim is allowed)
    else:
        # Prefer a sub_align-aligned block_rows that divides rows exactly so
        # the last block is not a masked vst.msk edge block.
        for cand in range(block_rows, max(sub_align, block_rows // 2) - 1, -sub_align):
            if rows % cand == 0:
                block_rows = cand
                break

    num_blocks = pl.cdiv(rows, block_rows)

    # On v7x, only CORE_PARALLEL actually shards the grid axis across the two
    # TensorCores; elsewhere (single-TC chips) fall back to PARALLEL.
    if gen == "v7x" and num_blocks >= 2:
        dim_sem = (pltpu.CORE_PARALLEL,)
    else:
        dim_sem = (pltpu.PARALLEL,)

    n = rows * lanes
    cost = pl.CostEstimate(
        flops=2 * n,                      # one mul + one add per element
        transcendentals=0,
        bytes_accessed=2 * n * itemsize,  # one read pass + one write pass
    )

    kwargs = {}
    if alias_input:
        # x2d is the 3rd positional argument of the pallas_call below.
        kwargs["input_output_aliases"] = {2: 0}

    return pl.pallas_call(
        _affine_kernel,
        out_shape=jax.ShapeDtypeStruct((rows, lanes), dtype),
        grid=(num_blocks,),
        in_specs=[
            pl.BlockSpec(memory_space=pltpu.SMEM),             # weight (1,)
            pl.BlockSpec(memory_space=pltpu.SMEM),             # bias   (1,)
            pl.BlockSpec((block_rows, lanes), lambda i: (i, 0)),
        ],
        out_specs=pl.BlockSpec((block_rows, lanes), lambda i: (i, 0)),
        compiler_params=pltpu.CompilerParams(
            dimension_semantics=dim_sem,
            vmem_limit_bytes=vmem_limit,
        ),
        cost_estimate=cost,
        **kwargs,
    )(weight, bias, x2d)


def linear_model_forward(x, weight, bias, *, donate_input=False):
    """y = x * weight + bias, weight/bias of shape (1,) broadcast over x.

    `donate_input=True` aliases the output onto the input buffer
    (input_output_aliases) to halve peak HBM footprint; callers that jit this
    should additionally pass donate_argnums for x at the jit boundary.
    """
    orig_shape = x.shape
    n = x.size
    weight = jnp.asarray(weight).reshape((1,))
    bias = jnp.asarray(bias).reshape((1,))

    if n == 0:
        return jnp.reshape(x * weight[0] + bias[0], orig_shape)

    x_flat = jnp.reshape(x, (-1,))

    lanes = None
    for cand in _LANE_CANDIDATES:
        if n % cand == 0:
            lanes = cand
            break

    if lanes is not None:
        # Common path: no padding, no extra HBM passes.
        x2d = jnp.reshape(x_flat, (n // lanes, lanes))
        out2d = _affine_2d(x2d, weight, bias, alias_input=donate_input)
        return jnp.reshape(out2d, orig_shape)

    # Ragged size (n % 128 != 0), rare path: bulk (Pallas) + tail (<128 elems,
    # plain XLA) split instead of pad + slice round trips.
    n_bulk = (n // 128) * 128
    tail = (x_flat[n_bulk:] * weight[0] + bias[0]).astype(x.dtype)
    if n_bulk == 0:
        out_flat = tail
    else:
        x2d = jnp.reshape(x_flat[:n_bulk], (n_bulk // 128, 128))
        bulk = jnp.reshape(_affine_2d(x2d, weight, bias, alias_input=False), (-1,))
        out_flat = jnp.concatenate([bulk, tail])
    return jnp.reshape(out_flat, orig_shape)


if __name__ == "__main__":
    key = jax.random.PRNGKey(0)
    k_x, k_w, k_b = jax.random.split(key, 3)

    # Small deterministic input consistent with the module's elementwise forward.
    x = jax.random.normal(k_x, (2, 4, 16, 16), dtype=jnp.float32)

    # Parameters: torch.randn(1) equivalents, deterministic in-script.
    weight = jax.random.normal(k_w, (1,), dtype=jnp.float32)
    bias = jax.random.normal(k_b, (1,), dtype=jnp.float32)

    y = linear_model_forward(x, weight, bias)
    y = jax.block_until_ready(y)
    y_ref = x * weight + bias
    assert y.shape == x.shape
    assert jnp.allclose(y, y_ref, atol=1e-6), "mismatch vs reference"

    # Also exercise the ragged (bulk + tail) path: 300 elements -> 256 via
    # Pallas, 44 via XLA tail.
    x_rag = jax.random.normal(k_x, (10, 30), dtype=jnp.float32)
    y_rag = jax.block_until_ready(linear_model_forward(x_rag, weight, bias))
    assert y_rag.shape == x_rag.shape
    assert jnp.allclose(y_rag, x_rag * weight + bias, atol=1e-6), "ragged mismatch"

    print("KERNEL_OK")
</pallas_src>

<mosaic_0001>
module attributes {stable_mosaic.version = 11 : i64} {
  func.func @_affine_kernel(%arg0: i32, %arg1: memref<1xf32, #tpu.memory_space<smem>>, %arg2: memref<1xf32, #tpu.memory_space<smem>>, %arg3: memref<1x2048xf32, #tpu.memory_space<vmem>>, %arg4: memref<1x2048xf32, #tpu.memory_space<vmem>>) attributes {dimension_semantics = [#tpu.dimension_semantics<parallel>], iteration_bounds = array<i64: 1>, scalar_prefetch = 0 : i64, scratch_operands = 0 : i64, tpu.core_type = #tpu.core_type<tc>, window_params = [{transform_indices = @transform_0, window_bounds = array<i64: 1>}, {transform_indices = @transform_1, window_bounds = array<i64: 1>}, {transform_indices = @transform_2, window_bounds = array<i64: 1, 2048>}, {transform_indices = @transform_3, window_bounds = array<i64: 1, 2048>}]} {
    %c0 = arith.constant 0 : index
    %0 = memref.load %arg1[%c0] : memref<1xf32, #tpu.memory_space<smem>>
    %c0_0 = arith.constant 0 : index
    %1 = memref.load %arg2[%c0_0] : memref<1xf32, #tpu.memory_space<smem>>
    %c0_1 = arith.constant 0 : index
    %c0_2 = arith.constant 0 : index
    %2 = vector.load %arg3[%c0_1, %c0_2] : memref<1x2048xf32, #tpu.memory_space<vmem>>, vector<1x2048xf32>
    %3 = vector.broadcast %0 : f32 to vector<1x2048xf32>
    %4 = arith.mulf %2, %3 : vector<1x2048xf32>
    %5 = vector.broadcast %1 : f32 to vector<1x2048xf32>
    %6 = arith.addf %4, %5 : vector<1x2048xf32>
    %c0_3 = arith.constant 0 : index
    %c0_4 = arith.constant 0 : index
    %7 = vector.load %arg4[%c0_3, %c0_4] : memref<1x2048xf32, #tpu.memory_space<vmem>>, vector<1x2048xf32>
    tpu.vector_store %arg4[%c0_3, %c0_4], %6 {strides = array<i32>} : memref<1x2048xf32, #tpu.memory_space<vmem>>, vector<1x2048xf32>,
    return
  }
  func.func @transform_0(%arg0: i32) -> i32 {
    %c0_i32 = arith.constant 0 : i32
    %c0_i32_0 = arith.constant 0 : i32
    return %c0_i32 : i32
  }
  func.func @transform_1(%arg0: i32) -> i32 {
    %c0_i32 = arith.constant 0 : i32
    %c0_i32_0 = arith.constant 0 : i32
    return %c0_i32 : i32
  }
  func.func @transform_2(%arg0: i32) -> (i32, i32) {
    %c0_i32 = arith.constant 0 : i32
    %c0_i32_0 = arith.constant 0 : i32
    return %arg0, %c0_i32 : i32, i32
  }
  func.func @transform_3(%arg0: i32) -> (i32, i32) {
    %c0_i32 = arith.constant 0 : i32
    %c0_i32_0 = arith.constant 0 : i32
    return %arg0, %c0_i32 : i32, i32
  }
}

</mosaic_0001>

<llo_original>
// kernel: tpu_custom_call.1
$region0: #{tpu_custom_call.1}
  #allocation0 [shape = 'u32[]', space=smem, size = 0x4, offset = 0x4, fixed_abs, tag = 'smem constant byte address 0x4 - core index']
  #allocation1 [shape = 'u32[144,128]{1,0:T(1,128)}', space=vmem, size = 0x12000, scoped, tag = 'internal scratch']
  #allocation2 [shape = 'f32[1]{0:T(128)S(6)}', space=smem, size = 0x200, scoped, tag = 'scoped memory for tpu_custom_call.1']
  #allocation3 [shape = 'f32[1]{0:T(128)S(6)}', space=smem, size = 0x200, scoped, tag = 'scoped memory for tpu_custom_call.1']
  %s0 = inlined_call_operand.<no memory space> [shape: f32[1], index: 0, kind: input, shape index: {}]
  %s1 = inlined_call_operand.<no memory space> [shape: f32[1], index: 1, kind: input, shape index: {}]
  %s2 = inlined_call_operand.hbm [shape: f32[1,2048], index: 2, kind: input, shape index: {}]
  %s3 = inlined_call_operand.hbm [shape: f32[1,2048], index: 3, kind: output, shape index: {}]
  %s4 = sld [smem:[#allocation0]]
  $region26: #{tpu_custom_call.1} parent=0
    _
  %s6 = ssub.s32 1, %s4
  %s7 = scalar_select 0, %s6, %s4
  %8 = sst [smem:[#allocation2]] %s0
  %9 = sst [smem:[#allocation3]] %s1
  $region1: #{tpu_custom_call.1} parent=0
    #allocation4 [shape = 'u8[8192]{0}', space=vmem, size = 0x2000, scoped, tag = 'input window, operand 2, single buffered']
    #allocation5 [shape = 's32[1]{0}', space=sflag, size = 0x4, scoped, tag = 'scoped memory for tpu_custom_call.1']
    #allocation6 [shape = 's32[1]{0}', space=sflag, size = 0x4, scoped, tag = 'scoped memory for tpu_custom_call.1']
    #allocation7 [shape = 'u8[8192]{0}', space=vmem, size = 0x2000, scoped, tag = 'output window, operand 0, single buffered']
    %10 = vsyncpa [#allocation5], 0
    %11 = vsyncpa [#allocation6], 0
    // Predicated region
    $region2: #{tpu_custom_call.1} parent=1 // pred_check
      _
    $region3: #{tpu_custom_call.1} parent=1 // pred_check_branch
      %13 = sbr.rel (0) target = $region5
    $region4: #{tpu_custom_call.1} parent=1 // pred_region
      _
    $region5: #{tpu_custom_call.1} parent=1 // pred_fallthru
      _
    // Predicated region
    $region6: #{tpu_custom_call.1} parent=1 // pred_check
      _
    $region7: #{tpu_custom_call.1} parent=1 // pred_check_branch
      %15 = sbr.rel (0) target = $region9
    $region8: #{tpu_custom_call.1} parent=1 // pred_region
      _
    $region9: #{tpu_custom_call.1} parent=1 // pred_fallthru
      _
    // Predicated region
    $region10: #{tpu_custom_call.1} parent=1 // pred_check
      _
    $region11: #{tpu_custom_call.1} parent=1 // pred_check_branch
      %17 = sbr.rel (0) target = $region13
    $region12: #{tpu_custom_call.1} parent=1 // pred_region
      %s19 = ssub.s32 256, 256
      %20 = vsyncadd [#allocation5], %s19
      %s22 = sshll.u32 [#allocation4], 4
      %s23 = int_to_ptr.vmem [resolvable:$true] %s22
      %25 = dma.hbm_to_vmem [thread:$0]  %s2, 256, %s23, [#allocation5]
    $region13: #{tpu_custom_call.1} parent=1 // pred_fallthru
      _
    // Predicated region
    $region14: #{tpu_custom_call.1} parent=1 // pred_check
      _
    $region15: #{tpu_custom_call.1} parent=1 // pred_check_branch
      %27 = sbr.rel (0) target = $region17
    $region16: #{tpu_custom_call.1} parent=1 // pred_region
      %28 = dma.done [#allocation5], 256
    $region17: #{tpu_custom_call.1} parent=1 // pred_fallthru
      _
    %s29 = sld [smem:[#allocation2]]
    %s30 = sld [smem:[#allocation3]]
    %v31 = vld [vmem:[#allocation4] sm:$0xff]
    %v32 = vld [vmem:[#allocation4 + $0x8] sm:$0xff]
    %v33 = vstv %s29
    %v34 = vmul.f32 %v31, %v33
    %v35 = vmul.f32 %v32, %v33
    %v36 = vstv %s30
    %v37 = vadd.f32 %v34, %v36
    %v38 = vadd.f32 %v35, %v36
    %39 = vst [vmem:[#allocation7] sm:$0xff] %v37
    %40 = vst [vmem:[#allocation7 + $0x8] sm:$0xff] %v38
    // Predicated region
    $region18: #{tpu_custom_call.1} parent=1 // pred_check
      _
    $region19: #{tpu_custom_call.1} parent=1 // pred_check_branch
      %42 = sbr.rel (0) target = $region21
    $region20: #{tpu_custom_call.1} parent=1 // pred_region
      %s44 = ssub.s32 256, 256
      %45 = vsyncadd [#allocation6], %s44
      %s47 = sshll.u32 [#allocation7], 4
      %s48 = int_to_ptr.vmem [resolvable:$true] %s47
      %50 = dma.vmem_to_hbm [thread:$0]  %s48, 256, %s3, [#allocation6]
    $region21: #{tpu_custom_call.1} parent=1 // pred_fallthru
      _
    // Predicated region
    $region22: #{tpu_custom_call.1} parent=1 // pred_check
      _
    $region23: #{tpu_custom_call.1} parent=1 // pred_check_branch
      %52 = sbr.rel (0) target = $region25
    $region24: #{tpu_custom_call.1} parent=1 // pred_region
      %53 = dma.done [#allocation6], 256
    $region25: #{tpu_custom_call.1} parent=1 // pred_fallthru
      _
    %54 = vsyncpa [#allocation5], 1
    %55 = vsyncpa [#allocation6], 1

</llo_original>
